<compile_context>
chip_gen: v5e
topology: v5e:2x2
jax: 0.10.0
libtpu: 0.0.40
codegen_flags: <defaults>
</compile_context>

<pallas_src>
import math

import jax
import jax.numpy as jnp
from jax.experimental import pallas as pl
from jax.experimental.pallas import tpu as pltpu

# hparams (small, synthetic)
LENGTH_FEATURE = 32   # hparams.length_feature  (channel dim C)
SEQ_LEN = 16          # sequence length L
BATCH = 2

K_TAPS = 8            # 7 composed taps + 1 zero tap -> 8*C = 256 contraction lanes


def _conv_out_len(L, k=3, s=2, p=1):
    return (L + 2 * p - k) // s + 1


def compose_weights(w1, w2, seq_len):
    """Fold conv_1 (k=3,s=2,p=1) o conv_2 (k=3,s=2,p=1) into one k=7/s=4/p=3 conv.

    Returns the lane-packed, pre-transposed effective weight of shape
    (C, 8*C) with w_eff_t[co, j*C + ci] = sum_{k1 + 2*k2 == j} (W1_k1 @ W2_k2)[ci, co]
    (tap j = 7 is all zeros so the contraction width is exactly 8*C = 256 lanes).

    Runs ONCE at parameter-load time, outside the jitted forward (perf review:
    do not rebuild the composition on every call).
    """
    C = w1.shape[0]
    L1 = _conv_out_len(seq_len)
    L2 = _conv_out_len(L1)
    # Exactness of the composition: conv_2 may read conv_1's index -1 zero pad
    # (reproduced exactly by the composed left pad) but must never read past
    # conv_1's last real output.
    assert 2 * L2 - 1 <= L1 - 1, (
        "two-conv composition is not exact for this sequence length; "
        "use a two-stage kernel instead")

    w1_t = jnp.transpose(w1, (2, 1, 0)).astype(jnp.float32)   # (3, C_in, C_mid)
    w2_t = jnp.transpose(w2, (2, 1, 0)).astype(jnp.float32)   # (3, C_mid, C_out)
    taps = [jnp.zeros((C, C), jnp.float32) for _ in range(K_TAPS)]
    for k1 in range(3):
        for k2 in range(3):
            j = 2 * k2 + k1                                   # composed tap, 0..6
            taps[j] = taps[j] + jax.lax.dot(
                w1_t[k1], w2_t[k2], precision=jax.lax.Precision.HIGHEST)
    w_eff = jnp.concatenate(taps, axis=0)                     # (8*C, C)
    return jnp.transpose(w_eff)                               # (C, 8*C)


def make_kernel(B, L, C, L2):
    """Grid-free kernel: in-kernel im2col + one K=8*C MXU pass + final layout."""
    NT_DIMS = (((1,), (1,)), ((), ()))   # contract last dim of both operands

    def kernel(x_ref, w_ref, o_ref, col_ref):
        # x_ref  : (B, L, C)        raw input straight from HBM (no wrapper prep)
        # w_ref  : (C, 8*C)         composed + pre-transposed weight (tap 7 == 0)
        # o_ref  : (B, C, L2)       final pre-unsqueeze layout
        # col_ref: (B*L2, 8*C)      im2col scratch: one 256-lane row per output pos

        # Zero-fill covers both the conv zero padding (taps that fall before the
        # input) and the unused zero tap 7.
        col_ref[...] = jnp.zeros_like(col_ref)

        # In-kernel im2col: scatter each input row into the (window, tap) lane
        # slot(s) it feeds.  All indices are static Python ints -> plain masked
        # vld/vst; no sublane-offset window slices and no strided loads.
        for b in range(B):
            for i in range(L):
                v = x_ref[b, pl.ds(i, 1), :]                  # (1, C)
                for l2 in range(L2):
                    j = i + 3 - 4 * l2                        # tap index in window l2
                    if 0 <= j < 7:                            # taps 0..6 carry weight
                        col_ref[pl.ds(b * L2 + l2, 1), pl.ds(j * C, C)] = v

        # ONE MXU pass for the whole batch, K = 8*C = 256 (full contraction width
        # on v6e/v7x, two passes on v5e, accumulation stays inside the MXU).
        # NT orientation (the q@k.T pattern): result is (C, B*L2), i.e. already
        # in the final channel-major orientation -> no transpose anywhere.
        acc_t = jax.lax.dot_general(w_ref[...], col_ref[...], NT_DIMS,
                                    preferred_element_type=jnp.float32)  # (C, B*L2)

        # Final layout written in-kernel: per-batch lane slices of (C, L2).
        for b in range(B):
            o_ref[b] = acc_t[:, b * L2:(b + 1) * L2].astype(o_ref.dtype)

    return kernel


@jax.jit
def image_embedding_finetune(image_out, w_eff_t):
    """image_out: (B, L, C) float32 (the tensor the PyTorch forward receives).
    w_eff_t: (C, 8*C) composed weight from compose_weights() (computed once).
    Returns (B, C, 1, L2), matching `out.unsqueeze(2)`."""
    B, L, C = image_out.shape
    L1 = _conv_out_len(L)
    L2 = _conv_out_len(L1)
    assert w_eff_t.shape == (C, K_TAPS * C), w_eff_t.shape

    out = pl.pallas_call(
        make_kernel(B, L, C, L2),
        out_shape=jax.ShapeDtypeStruct((B, C, L2), jnp.float32),
        in_specs=[pl.BlockSpec(memory_space=pltpu.MemorySpace.VMEM),
                  pl.BlockSpec(memory_space=pltpu.MemorySpace.VMEM)],
        out_specs=pl.BlockSpec(memory_space=pltpu.MemorySpace.VMEM),
        scratch_shapes=[pltpu.VMEM((B * L2, K_TAPS * C), jnp.float32)],
    )(image_out, w_eff_t)

    # NOTE: `self.relu(self.bn_1(out))` in the PyTorch forward is dead code on
    # the data path (its result is never assigned), so it is omitted here.
    # TODO(synk): BatchNorm running-stat updates (training-mode side effect of
    # the discarded bn_1 call) are not reproduced; they do not affect outputs.

    # unsqueeze(2): inserting a size-1 dim on a row-major array is a bitcast in
    # XLA (no extra device program); the transpose itself was done in-kernel.
    return out[:, :, None, :]


def _reference(image_out, w1, w2):
    """Pure-JAX reference reproducing the PyTorch forward exactly."""
    xc = jnp.transpose(image_out, (0, 2, 1))                  # (B, C, L)
    dn = jax.lax.conv_dimension_numbers(xc.shape, w1.shape, ('NCH', 'OIH', 'NCH'))
    y = jax.lax.conv_general_dilated(xc, w1, window_strides=(2,), padding=[(1, 1)],
                                     dimension_numbers=dn,
                                     precision=jax.lax.Precision.HIGHEST)
    y = jax.lax.conv_general_dilated(y, w2, window_strides=(2,), padding=[(1, 1)],
                                     dimension_numbers=dn,
                                     precision=jax.lax.Precision.HIGHEST)
    return y[:, :, None, :]                                    # unsqueeze(2)


if __name__ == "__main__":
    key = jax.random.PRNGKey(0)
    kx, k1, k2 = jax.random.split(key, 3)

    C = LENGTH_FEATURE
    # deterministic synthetic parameters (PyTorch Conv1d-style uniform init)
    bound = 1.0 / math.sqrt(C * 3)
    w1 = jax.random.uniform(k1, (C, C, 3), jnp.float32, -bound, bound)
    w2 = jax.random.uniform(k2, (C, C, 3), jnp.float32, -bound, bound)
    # bn_1 / bn_2 parameters exist in the module but never affect the output.

    x = jax.random.normal(kx, (BATCH, SEQ_LEN, C), jnp.float32)

    # one-time weight composition (parameter-load time, outside the forward jit)
    w_eff_t = jax.block_until_ready(compose_weights(w1, w2, SEQ_LEN))

    out = jax.block_until_ready(image_embedding_finetune(x, w_eff_t))
    ref = jax.block_until_ready(_reference(x, w1, w2))

    L2 = _conv_out_len(_conv_out_len(SEQ_LEN))
    assert out.shape == (BATCH, C, 1, L2), out.shape
    max_err = float(jnp.max(jnp.abs(out - ref)))
    assert jnp.allclose(out, ref, rtol=5e-5, atol=5e-5), max_err

    print("KERNEL_OK")
</pallas_src>

<mosaic_0001>
module attributes {stable_mosaic.version = 11 : i64} {
  func.func @kernel(%arg0: memref<2x16x32xf32, #tpu.memory_space<vmem>>, %arg1: memref<32x256xf32, #tpu.memory_space<vmem>>, %arg2: memref<2x32x4xf32, #tpu.memory_space<vmem>>, %arg3: memref<8x256xf32, #tpu.memory_space<vmem>>) attributes {dimension_semantics = [], scalar_prefetch = 0 : i64, scratch_operands = 1 : i64, tpu.core_type = #tpu.core_type<tc>} {
    %cst = arith.constant 0.000000e+00 : f32
    %0 = vector.broadcast %cst : f32 to vector<8x256xf32>
    %c0 = arith.constant 0 : index
    %c0_0 = arith.constant 0 : index
    %1 = vector.load %arg3[%c0, %c0_0] : memref<8x256xf32, #tpu.memory_space<vmem>>, vector<8x256xf32>
    tpu.vector_store %arg3[%c0, %c0_0], %0 {strides = array<i32>} : memref<8x256xf32, #tpu.memory_space<vmem>>, vector<8x256xf32>,
    %c0_1 = arith.constant 0 : index
    %c0_2 = arith.constant 0 : index
    %c0_3 = arith.constant 0 : index
    %2 = vector.load %arg0[%c0_1, %c0_2, %c0_3] : memref<2x16x32xf32, #tpu.memory_space<vmem>>, vector<1x1x32xf32>
    %3 = vector.shape_cast %2 : vector<1x1x32xf32> to vector<1x32xf32>
    %c0_4 = arith.constant 0 : index
    %c96 = arith.constant 96 : index
    %4 = vector.load %arg3[%c0_4, %c96] : memref<8x256xf32, #tpu.memory_space<vmem>>, vector<1x32xf32>
    tpu.vector_store %arg3[%c0_4, %c96], %3 {strides = array<i32>} : memref<8x256xf32, #tpu.memory_space<vmem>>, vector<1x32xf32>,
    %c0_5 = arith.constant 0 : index
    %c1 = arith.constant 1 : index
    %c0_6 = arith.constant 0 : index
    %5 = vector.load %arg0[%c0_5, %c1, %c0_6] : memref<2x16x32xf32, #tpu.memory_space<vmem>>, vector<1x1x32xf32>
    %6 = vector.shape_cast %5 : vector<1x1x32xf32> to vector<1x32xf32>
    %c0_7 = arith.constant 0 : index
    %c128 = arith.constant 128 : index
    %7 = vector.load %arg3[%c0_7, %c128] : memref<8x256xf32, #tpu.memory_space<vmem>>, vector<1x32xf32>
    tpu.vector_store %arg3[%c0_7, %c128], %6 {strides = array<i32>} : memref<8x256xf32, #tpu.memory_space<vmem>>, vector<1x32xf32>,
    %c1_8 = arith.constant 1 : index
    %c0_9 = arith.constant 0 : index
    %8 = vector.load %arg3[%c1_8, %c0_9] : memref<8x256xf32, #tpu.memory_space<vmem>>, vector<1x32xf32>
    tpu.vector_store %arg3[%c1_8, %c0_9], %6 {strides = array<i32>} : memref<8x256xf32, #tpu.memory_space<vmem>>, vector<1x32xf32>,
    %c0_10 = arith.constant 0 : index
    %c2 = arith.constant 2 : index
    %c0_11 = arith.constant 0 : index
    %9 = vector.load %arg0[%c0_10, %c2, %c0_11] : memref<2x16x32xf32, #tpu.memory_space<vmem>>, vector<1x1x32xf32>
    %10 = vector.shape_cast %9 : vector<1x1x32xf32> to vector<1x32xf32>
    %c0_12 = arith.constant 0 : index
    %c160 = arith.constant 160 : index
    %11 = vector.load %arg3[%c0_12, %c160] : memref<8x256xf32, #tpu.memory_space<vmem>>, vector<1x32xf32>
    tpu.vector_store %arg3[%c0_12, %c160], %10 {strides = array<i32>} : memref<8x256xf32, #tpu.memory_space<vmem>>, vector<1x32xf32>,
    %c1_13 = arith.constant 1 : index
    %c32 = arith.constant 32 : index
    %12 = vector.load %arg3[%c1_13, %c32] : memref<8x256xf32, #tpu.memory_space<vmem>>, vector<1x32xf32>
    tpu.vector_store %arg3[%c1_13, %c32], %10 {strides = array<i32>} : memref<8x256xf32, #tpu.memory_space<vmem>>, vector<1x32xf32>,
    %c0_14 = arith.constant 0 : index
    %c3 = arith.constant 3 : index
    %c0_15 = arith.constant 0 : index
    %13 = vector.load %arg0[%c0_14, %c3, %c0_15] : memref<2x16x32xf32, #tpu.memory_space<vmem>>, vector<1x1x32xf32>
    %14 = vector.shape_cast %13 : vector<1x1x32xf32> to vector<1x32xf32>
    %c0_16 = arith.constant 0 : index
    %c192 = arith.constant 192 : index
    %15 = vector.load %arg3[%c0_16, %c192] : memref<8x256xf32, #tpu.memory_space<vmem>>, vector<1x32xf32>
    tpu.vector_store %arg3[%c0_16, %c192], %14 {strides = array<i32>} : memref<8x256xf32, #tpu.memory_space<vmem>>, vector<1x32xf32>,
    %c1_17 = arith.constant 1 : index
    %c64 = arith.constant 64 : index
    %16 = vector.load %arg3[%c1_17, %c64] : memref<8x256xf32, #tpu.memory_space<vmem>>, vector<1x32xf32>
    tpu.vector_store %arg3[%c1_17, %c64], %14 {strides = array<i32>} : memref<8x256xf32, #tpu.memory_space<vmem>>, vector<1x32xf32>,
    %c0_18 = arith.constant 0 : index
    %c4 = arith.constant 4 : index
    %c0_19 = arith.constant 0 : index
    %17 = vector.load %arg0[%c0_18, %c4, %c0_19] : memref<2x16x32xf32, #tpu.memory_space<vmem>>, vector<1x1x32xf32>
    %18 = vector.shape_cast %17 : vector<1x1x32xf32> to vector<1x32xf32>
    %c1_20 = arith.constant 1 : index
    %c96_21 = arith.constant 96 : index
    %19 = vector.load %arg3[%c1_20, %c96_21] : memref<8x256xf32, #tpu.memory_space<vmem>>, vector<1x32xf32>
    tpu.vector_store %arg3[%c1_20, %c96_21], %18 {strides = array<i32>} : memref<8x256xf32, #tpu.memory_space<vmem>>, vector<1x32xf32>,
    %c0_22 = arith.constant 0 : index
    %c5 = arith.constant 5 : index
    %c0_23 = arith.constant 0 : index
    %20 = vector.load %arg0[%c0_22, %c5, %c0_23] : memref<2x16x32xf32, #tpu.memory_space<vmem>>, vector<1x1x32xf32>
    %21 = vector.shape_cast %20 : vector<1x1x32xf32> to vector<1x32xf32>
    %c1_24 = arith.constant 1 : index
    %c128_25 = arith.constant 128 : index
    %22 = vector.load %arg3[%c1_24, %c128_25] : memref<8x256xf32, #tpu.memory_space<vmem>>, vector<1x32xf32>
    tpu.vector_store %arg3[%c1_24, %c128_25], %21 {strides = array<i32>} : memref<8x256xf32, #tpu.memory_space<vmem>>, vector<1x32xf32>,
    %c2_26 = arith.constant 2 : index
    %c0_27 = arith.constant 0 : index
    %23 = vector.load %arg3[%c2_26, %c0_27] : memref<8x256xf32, #tpu.memory_space<vmem>>, vector<1x32xf32>
    tpu.vector_store %arg3[%c2_26, %c0_27], %21 {strides = array<i32>} : memref<8x256xf32, #tpu.memory_space<vmem>>, vector<1x32xf32>,
    %c0_28 = arith.constant 0 : index
    %c6 = arith.constant 6 : index
    %c0_29 = arith.constant 0 : index
    %24 = vector.load %arg0[%c0_28, %c6, %c0_29] : memref<2x16x32xf32, #tpu.memory_space<vmem>>, vector<1x1x32xf32>
    %25 = vector.shape_cast %24 : vector<1x1x32xf32> to vector<1x32xf32>
    %c1_30 = arith.constant 1 : index
    %c160_31 = arith.constant 160 : index
    %26 = vector.load %arg3[%c1_30, %c160_31] : memref<8x256xf32, #tpu.memory_space<vmem>>, vector<1x32xf32>
    tpu.vector_store %arg3[%c1_30, %c160_31], %25 {strides = array<i32>} : memref<8x256xf32, #tpu.memory_space<vmem>>, vector<1x32xf32>,
    %c2_32 = arith.constant 2 : index
    %c32_33 = arith.constant 32 : index
    %27 = vector.load %arg3[%c2_32, %c32_33] : memref<8x256xf32, #tpu.memory_space<vmem>>, vector<1x32xf32>
    tpu.vector_store %arg3[%c2_32, %c32_33], %25 {strides = array<i32>} : memref<8x256xf32, #tpu.memory_space<vmem>>, vector<1x32xf32>,
    %c0_34 = arith.constant 0 : index
    %c7 = arith.constant 7 : index
    %c0_35 = arith.constant 0 : index
    %28 = vector.load %arg0[%c0_34, %c7, %c0_35] : memref<2x16x32xf32, #tpu.memory_space<vmem>>, vector<1x1x32xf32>
    %29 = vector.shape_cast %28 : vector<1x1x32xf32> to vector<1x32xf32>
    %c1_36 = arith.constant 1 : index
    %c192_37 = arith.constant 192 : index
    %30 = vector.load %arg3[%c1_36, %c192_37] : memref<8x256xf32, #tpu.memory_space<vmem>>, vector<1x32xf32>
    tpu.vector_store %arg3[%c1_36, %c192_37], %29 {strides = array<i32>} : memref<8x256xf32, #tpu.memory_space<vmem>>, vector<1x32xf32>,
    %c2_38 = arith.constant 2 : index
    %c64_39 = arith.constant 64 : index
    %31 = vector.load %arg3[%c2_38, %c64_39] : memref<8x256xf32, #tpu.memory_space<vmem>>, vector<1x32xf32>
    tpu.vector_store %arg3[%c2_38, %c64_39], %29 {strides = array<i32>} : memref<8x256xf32, #tpu.memory_space<vmem>>, vector<1x32xf32>,
    %c0_40 = arith.constant 0 : index
    %c8 = arith.constant 8 : index
    %c0_41 = arith.constant 0 : index
    %32 = vector.load %arg0[%c0_40, %c8, %c0_41] : memref<2x16x32xf32, #tpu.memory_space<vmem>>, vector<1x1x32xf32>
    %33 = vector.shape_cast %32 : vector<1x1x32xf32> to vector<1x32xf32>
    %c2_42 = arith.constant 2 : index
    %c96_43 = arith.constant 96 : index
    %34 = vector.load %arg3[%c2_42, %c96_43] : memref<8x256xf32, #tpu.memory_space<vmem>>, vector<1x32xf32>
    tpu.vector_store %arg3[%c2_42, %c96_43], %33 {strides = array<i32>} : memref<8x256xf32, #tpu.memory_space<vmem>>, vector<1x32xf32>,
    %c0_44 = arith.constant 0 : index
    %c9 = arith.constant 9 : index
    %c0_45 = arith.constant 0 : index
    %35 = vector.load %arg0[%c0_44, %c9, %c0_45] : memref<2x16x32xf32, #tpu.memory_space<vmem>>, vector<1x1x32xf32>
    %36 = vector.shape_cast %35 : vector<1x1x32xf32> to vector<1x32xf32>
    %c2_46 = arith.constant 2 : index
    %c128_47 = arith.constant 128 : index
    %37 = vector.load %arg3[%c2_46, %c128_47] : memref<8x256xf32, #tpu.memory_space<vmem>>, vector<1x32xf32>
    tpu.vector_store %arg3[%c2_46, %c128_47], %36 {strides = array<i32>} : memref<8x256xf32, #tpu.memory_space<vmem>>, vector<1x32xf32>,
    %c3_48 = arith.constant 3 : index
    %c0_49 = arith.constant 0 : index
    %38 = vector.load %arg3[%c3_48, %c0_49] : memref<8x256xf32, #tpu.memory_space<vmem>>, vector<1x32xf32>
    tpu.vector_store %arg3[%c3_48, %c0_49], %36 {strides = array<i32>} : memref<8x256xf32, #tpu.memory_space<vmem>>, vector<1x32xf32>,
    %c0_50 = arith.constant 0 : index
    %c10 = arith.constant 10 : index
    %c0_51 = arith.constant 0 : index
    %39 = vector.load %arg0[%c0_50, %c10, %c0_51] : memref<2x16x32xf32, #tpu.memory_space<vmem>>, vector<1x1x32xf32>
    %40 = vector.shape_cast %39 : vector<1x1x32xf32> to vector<1x32xf32>
    %c2_52 = arith.constant 2 : index
    %c160_53 = arith.constant 160 : index
    %41 = vector.load %arg3[%c2_52, %c160_53] : memref<8x256xf32, #tpu.memory_space<vmem>>, vector<1x32xf32>
    tpu.vector_store %arg3[%c2_52, %c160_53], %40 {strides = array<i32>} : memref<8x256xf32, #tpu.memory_space<vmem>>, vector<1x32xf32>,
    %c3_54 = arith.constant 3 : index
    %c32_55 = arith.constant 32 : index
    %42 = vector.load %arg3[%c3_54, %c32_55] : memref<8x256xf32, #tpu.memory_space<vmem>>, vector<1x32xf32>
    tpu.vector_store %arg3[%c3_54, %c32_55], %40 {strides = array<i32>} : memref<8x256xf32, #tpu.memory_space<vmem>>, vector<1x32xf32>,
    %c0_56 = arith.constant 0 : index
    %c11 = arith.constant 11 : index
    %c0_57 = arith.constant 0 : index
    %43 = vector.load %arg0[%c0_56, %c11, %c0_57] : memref<2x16x32xf32, #tpu.memory_space<vmem>>, vector<1x1x32xf32>
    %44 = vector.shape_cast %43 : vector<1x1x32xf32> to vector<1x32xf32>
    %c2_58 = arith.constant 2 : index
    %c192_59 = arith.constant 192 : index
    %45 = vector.load %arg3[%c2_58, %c192_59] : memref<8x256xf32, #tpu.memory_space<vmem>>, vector<1x32xf32>
    tpu.vector_store %arg3[%c2_58, %c192_59], %44 {strides = array<i32>} : memref<8x256xf32, #tpu.memory_space<vmem>>, vector<1x32xf32>,
    %c3_60 = arith.constant 3 : index
    %c64_61 = arith.constant 64 : index
    %46 = vector.load %arg3[%c3_60, %c64_61] : memref<8x256xf32, #tpu.memory_space<vmem>>, vector<1x32xf32>
    tpu.vector_store %arg3[%c3_60, %c64_61], %44 {strides = array<i32>} : memref<8x256xf32, #tpu.memory_space<vmem>>, vector<1x32xf32>,
    %c0_62 = arith.constant 0 : index
    %c12 = arith.constant 12 : index
    %c0_63 = arith.constant 0 : index
    %47 = vector.load %arg0[%c0_62, %c12, %c0_63] : memref<2x16x32xf32, #tpu.memory_space<vmem>>, vector<1x1x32xf32>
    %48 = vector.shape_cast %47 : vector<1x1x32xf32> to vector<1x32xf32>
    %c3_64 = arith.constant 3 : index
    %c96_65 = arith.constant 96 : index
    %49 = vector.load %arg3[%c3_64, %c96_65] : memref<8x256xf32, #tpu.memory_space<vmem>>, vector<1x32xf32>
    tpu.vector_store %arg3[%c3_64, %c96_65], %48 {strides = array<i32>} : memref<8x256xf32, #tpu.memory_space<vmem>>, vector<1x32xf32>,
    %c0_66 = arith.constant 0 : index
    %c13 = arith.constant 13 : index
    %c0_67 = arith.constant 0 : index
    %50 = vector.load %arg0[%c0_66, %c13, %c0_67] : memref<2x16x32xf32, #tpu.memory_space<vmem>>, vector<1x1x32xf32>
    %51 = vector.shape_cast %50 : vector<1x1x32xf32> to vector<1x32xf32>
    %c3_68 = arith.constant 3 : index
    %c128_69 = arith.constant 128 : index
    %52 = vector.load %arg3[%c3_68, %c128_69] : memref<8x256xf32, #tpu.memory_space<vmem>>, vector<1x32xf32>
    tpu.vector_store %arg3[%c3_68, %c128_69], %51 {strides = array<i32>} : memref<8x256xf32, #tpu.memory_space<vmem>>, vector<1x32xf32>,
    %c0_70 = arith.constant 0 : index
    %c14 = arith.constant 14 : index
    %c0_71 = arith.constant 0 : index
    %53 = vector.load %arg0[%c0_70, %c14, %c0_71] : memref<2x16x32xf32, #tpu.memory_space<vmem>>, vector<1x1x32xf32>
    %54 = vector.shape_cast %53 : vector<1x1x32xf32> to vector<1x32xf32>
    %c3_72 = arith.constant 3 : index
    %c160_73 = arith.constant 160 : index
    %55 = vector.load %arg3[%c3_72, %c160_73] : memref<8x256xf32, #tpu.memory_space<vmem>>, vector<1x32xf32>
    tpu.vector_store %arg3[%c3_72, %c160_73], %54 {strides = array<i32>} : memref<8x256xf32, #tpu.memory_space<vmem>>, vector<1x32xf32>,
    %c0_74 = arith.constant 0 : index
    %c15 = arith.constant 15 : index
    %c0_75 = arith.constant 0 : index
    %56 = vector.load %arg0[%c0_74, %c15, %c0_75] : memref<2x16x32xf32, #tpu.memory_space<vmem>>, vector<1x1x32xf32>
    %57 = vector.shape_cast %56 : vector<1x1x32xf32> to vector<1x32xf32>
    %c3_76 = arith.constant 3 : index
    %c192_77 = arith.constant 192 : index
    %58 = vector.load %arg3[%c3_76, %c192_77] : memref<8x256xf32, #tpu.memory_space<vmem>>, vector<1x32xf32>
    tpu.vector_store %arg3[%c3_76, %c192_77], %57 {strides = array<i32>} : memref<8x256xf32, #tpu.memory_space<vmem>>, vector<1x32xf32>,
    %c1_78 = arith.constant 1 : index
    %c0_79 = arith.constant 0 : index
    %c0_80 = arith.constant 0 : index
    %59 = vector.load %arg0[%c1_78, %c0_79, %c0_80] : memref<2x16x32xf32, #tpu.memory_space<vmem>>, vector<1x1x32xf32>
    %60 = vector.shape_cast %59 : vector<1x1x32xf32> to vector<1x32xf32>
    %c4_81 = arith.constant 4 : index
    %c96_82 = arith.constant 96 : index
    %61 = vector.load %arg3[%c4_81, %c96_82] : memref<8x256xf32, #tpu.memory_space<vmem>>, vector<1x32xf32>
    tpu.vector_store %arg3[%c4_81, %c96_82], %60 {strides = array<i32>} : memref<8x256xf32, #tpu.memory_space<vmem>>, vector<1x32xf32>,
    %c1_83 = arith.constant 1 : index
    %c1_84 = arith.constant 1 : index
    %c0_85 = arith.constant 0 : index
    %62 = vector.load %arg0[%c1_83, %c1_84, %c0_85] : memref<2x16x32xf32, #tpu.memory_space<vmem>>, vector<1x1x32xf32>
    %63 = vector.shape_cast %62 : vector<1x1x32xf32> to vector<1x32xf32>
    %c4_86 = arith.constant 4 : index
    %c128_87 = arith.constant 128 : index
    %64 = vector.load %arg3[%c4_86, %c128_87] : memref<8x256xf32, #tpu.memory_space<vmem>>, vector<1x32xf32>
    tpu.vector_store %arg3[%c4_86, %c128_87], %63 {strides = array<i32>} : memref<8x256xf32, #tpu.memory_space<vmem>>, vector<1x32xf32>,
    %c5_88 = arith.constant 5 : index
    %c0_89 = arith.constant 0 : index
    %65 = vector.load %arg3[%c5_88, %c0_89] : memref<8x256xf32, #tpu.memory_space<vmem>>, vector<1x32xf32>
    tpu.vector_store %arg3[%c5_88, %c0_89], %63 {strides = array<i32>} : memref<8x256xf32, #tpu.memory_space<vmem>>, vector<1x32xf32>,
    %c1_90 = arith.constant 1 : index
    %c2_91 = arith.constant 2 : index
    %c0_92 = arith.constant 0 : index
    %66 = vector.load %arg0[%c1_90, %c2_91, %c0_92] : memref<2x16x32xf32, #tpu.memory_space<vmem>>, vector<1x1x32xf32>
    %67 = vector.shape_cast %66 : vector<1x1x32xf32> to vector<1x32xf32>
    %c4_93 = arith.constant 4 : index
    %c160_94 = arith.constant 160 : index
    %68 = vector.load %arg3[%c4_93, %c160_94] : memref<8x256xf32, #tpu.memory_space<vmem>>, vector<1x32xf32>
    tpu.vector_store %arg3[%c4_93, %c160_94], %67 {strides = array<i32>} : memref<8x256xf32, #tpu.memory_space<vmem>>, vector<1x32xf32>,
    %c5_95 = arith.constant 5 : index
    %c32_96 = arith.constant 32 : index
    %69 = vector.load %arg3[%c5_95, %c32_96] : memref<8x256xf32, #tpu.memory_space<vmem>>, vector<1x32xf32>
    tpu.vector_store %arg3[%c5_95, %c32_96], %67 {strides = array<i32>} : memref<8x256xf32, #tpu.memory_space<vmem>>, vector<1x32xf32>,
    %c1_97 = arith.constant 1 : index
    %c3_98 = arith.constant 3 : index
    %c0_99 = arith.constant 0 : index
    %70 = vector.load %arg0[%c1_97, %c3_98, %c0_99] : memref<2x16x32xf32, #tpu.memory_space<vmem>>, vector<1x1x32xf32>
    %71 = vector.shape_cast %70 : vector<1x1x32xf32> to vector<1x32xf32>
    %c4_100 = arith.constant 4 : index
    %c192_101 = arith.constant 192 : index
    %72 = vector.load %arg3[%c4_100, %c192_101] : memref<8x256xf32, #tpu.memory_space<vmem>>, vector<1x32xf32>
    tpu.vector_store %arg3[%c4_100, %c192_101], %71 {strides = array<i32>} : memref<8x256xf32, #tpu.memory_space<vmem>>, vector<1x32xf32>,
    %c5_102 = arith.constant 5 : index
    %c64_103 = arith.constant 64 : index
    %73 = vector.load %arg3[%c5_102, %c64_103] : memref<8x256xf32, #tpu.memory_space<vmem>>, vector<1x32xf32>
    tpu.vector_store %arg3[%c5_102, %c64_103], %71 {strides = array<i32>} : memref<8x256xf32, #tpu.memory_space<vmem>>, vector<1x32xf32>,
    %c1_104 = arith.constant 1 : index
    %c4_105 = arith.constant 4 : index
    %c0_106 = arith.constant 0 : index
    %74 = vector.load %arg0[%c1_104, %c4_105, %c0_106] : memref<2x16x32xf32, #tpu.memory_space<vmem>>, vector<1x1x32xf32>
    %75 = vector.shape_cast %74 : vector<1x1x32xf32> to vector<1x32xf32>
    %c5_107 = arith.constant 5 : index
    %c96_108 = arith.constant 96 : index
    %76 = vector.load %arg3[%c5_107, %c96_108] : memref<8x256xf32, #tpu.memory_space<vmem>>, vector<1x32xf32>
    tpu.vector_store %arg3[%c5_107, %c96_108], %75 {strides = array<i32>} : memref<8x256xf32, #tpu.memory_space<vmem>>, vector<1x32xf32>,
    %c1_109 = arith.constant 1 : index
    %c5_110 = arith.constant 5 : index
    %c0_111 = arith.constant 0 : index
    %77 = vector.load %arg0[%c1_109, %c5_110, %c0_111] : memref<2x16x32xf32, #tpu.memory_space<vmem>>, vector<1x1x32xf32>
    %78 = vector.shape_cast %77 : vector<1x1x32xf32> to vector<1x32xf32>
    %c5_112 = arith.constant 5 : index
    %c128_113 = arith.constant 128 : index
    %79 = vector.load %arg3[%c5_112, %c128_113] : memref<8x256xf32, #tpu.memory_space<vmem>>, vector<1x32xf32>
    tpu.vector_store %arg3[%c5_112, %c128_113], %78 {strides = array<i32>} : memref<8x256xf32, #tpu.memory_space<vmem>>, vector<1x32xf32>,
    %c6_114 = arith.constant 6 : index
    %c0_115 = arith.constant 0 : index
    %80 = vector.load %arg3[%c6_114, %c0_115] : memref<8x256xf32, #tpu.memory_space<vmem>>, vector<1x32xf32>
    tpu.vector_store %arg3[%c6_114, %c0_115], %78 {strides = array<i32>} : memref<8x256xf32, #tpu.memory_space<vmem>>, vector<1x32xf32>,
    %c1_116 = arith.constant 1 : index
    %c6_117 = arith.constant 6 : index
    %c0_118 = arith.constant 0 : index
    %81 = vector.load %arg0[%c1_116, %c6_117, %c0_118] : memref<2x16x32xf32, #tpu.memory_space<vmem>>, vector<1x1x32xf32>
    %82 = vector.shape_cast %81 : vector<1x1x32xf32> to vector<1x32xf32>
    %c5_119 = arith.constant 5 : index
    %c160_120 = arith.constant 160 : index
    %83 = vector.load %arg3[%c5_119, %c160_120] : memref<8x256xf32, #tpu.memory_space<vmem>>, vector<1x32xf32>
    tpu.vector_store %arg3[%c5_119, %c160_120], %82 {strides = array<i32>} : memref<8x256xf32, #tpu.memory_space<vmem>>, vector<1x32xf32>,
    %c6_121 = arith.constant 6 : index
    %c32_122 = arith.constant 32 : index
    %84 = vector.load %arg3[%c6_121, %c32_122] : memref<8x256xf32, #tpu.memory_space<vmem>>, vector<1x32xf32>
    tpu.vector_store %arg3[%c6_121, %c32_122], %82 {strides = array<i32>} : memref<8x256xf32, #tpu.memory_space<vmem>>, vector<1x32xf32>,
    %c1_123 = arith.constant 1 : index
    %c7_124 = arith.constant 7 : index
    %c0_125 = arith.constant 0 : index
    %85 = vector.load %arg0[%c1_123, %c7_124, %c0_125] : memref<2x16x32xf32, #tpu.memory_space<vmem>>, vector<1x1x32xf32>
    %86 = vector.shape_cast %85 : vector<1x1x32xf32> to vector<1x32xf32>
    %c5_126 = arith.constant 5 : index
    %c192_127 = arith.constant 192 : index
    %87 = vector.load %arg3[%c5_126, %c192_127] : memref<8x256xf32, #tpu.memory_space<vmem>>, vector<1x32xf32>
    tpu.vector_store %arg3[%c5_126, %c192_127], %86 {strides = array<i32>} : memref<8x256xf32, #tpu.memory_space<vmem>>, vector<1x32xf32>,
    %c6_128 = arith.constant 6 : index
    %c64_129 = arith.constant 64 : index
    %88 = vector.load %arg3[%c6_128, %c64_129] : memref<8x256xf32, #tpu.memory_space<vmem>>, vector<1x32xf32>
    tpu.vector_store %arg3[%c6_128, %c64_129], %86 {strides = array<i32>} : memref<8x256xf32, #tpu.memory_space<vmem>>, vector<1x32xf32>,
    %c1_130 = arith.constant 1 : index
    %c8_131 = arith.constant 8 : index
    %c0_132 = arith.constant 0 : index
    %89 = vector.load %arg0[%c1_130, %c8_131, %c0_132] : memref<2x16x32xf32, #tpu.memory_space<vmem>>, vector<1x1x32xf32>
    %90 = vector.shape_cast %89 : vector<1x1x32xf32> to vector<1x32xf32>
    %c6_133 = arith.constant 6 : index
    %c96_134 = arith.constant 96 : index
    %91 = vector.load %arg3[%c6_133, %c96_134] : memref<8x256xf32, #tpu.memory_space<vmem>>, vector<1x32xf32>
    tpu.vector_store %arg3[%c6_133, %c96_134], %90 {strides = array<i32>} : memref<8x256xf32, #tpu.memory_space<vmem>>, vector<1x32xf32>,
    %c1_135 = arith.constant 1 : index
    %c9_136 = arith.constant 9 : index
    %c0_137 = arith.constant 0 : index
    %92 = vector.load %arg0[%c1_135, %c9_136, %c0_137] : memref<2x16x32xf32, #tpu.memory_space<vmem>>, vector<1x1x32xf32>
    %93 = vector.shape_cast %92 : vector<1x1x32xf32> to vector<1x32xf32>
    %c6_138 = arith.constant 6 : index
    %c128_139 = arith.constant 128 : index
    %94 = vector.load %arg3[%c6_138, %c128_139] : memref<8x256xf32, #tpu.memory_space<vmem>>, vector<1x32xf32>
    tpu.vector_store %arg3[%c6_138, %c128_139], %93 {strides = array<i32>} : memref<8x256xf32, #tpu.memory_space<vmem>>, vector<1x32xf32>,
    %c7_140 = arith.constant 7 : index
    %c0_141 = arith.constant 0 : index
    %95 = vector.load %arg3[%c7_140, %c0_141] : memref<8x256xf32, #tpu.memory_space<vmem>>, vector<1x32xf32>
    tpu.vector_store %arg3[%c7_140, %c0_141], %93 {strides = array<i32>} : memref<8x256xf32, #tpu.memory_space<vmem>>, vector<1x32xf32>,
    %c1_142 = arith.constant 1 : index
    %c10_143 = arith.constant 10 : index
    %c0_144 = arith.constant 0 : index
    %96 = vector.load %arg0[%c1_142, %c10_143, %c0_144] : memref<2x16x32xf32, #tpu.memory_space<vmem>>, vector<1x1x32xf32>
    %97 = vector.shape_cast %96 : vector<1x1x32xf32> to vector<1x32xf32>
    %c6_145 = arith.constant 6 : index
    %c160_146 = arith.constant 160 : index
    %98 = vector.load %arg3[%c6_145, %c160_146] : memref<8x256xf32, #tpu.memory_space<vmem>>, vector<1x32xf32>
    tpu.vector_store %arg3[%c6_145, %c160_146], %97 {strides = array<i32>} : memref<8x256xf32, #tpu.memory_space<vmem>>, vector<1x32xf32>,
    %c7_147 = arith.constant 7 : index
    %c32_148 = arith.constant 32 : index
    %99 = vector.load %arg3[%c7_147, %c32_148] : memref<8x256xf32, #tpu.memory_space<vmem>>, vector<1x32xf32>
    tpu.vector_store %arg3[%c7_147, %c32_148], %97 {strides = array<i32>} : memref<8x256xf32, #tpu.memory_space<vmem>>, vector<1x32xf32>,
    %c1_149 = arith.constant 1 : index
    %c11_150 = arith.constant 11 : index
    %c0_151 = arith.constant 0 : index
    %100 = vector.load %arg0[%c1_149, %c11_150, %c0_151] : memref<2x16x32xf32, #tpu.memory_space<vmem>>, vector<1x1x32xf32>
    %101 = vector.shape_cast %100 : vector<1x1x32xf32> to vector<1x32xf32>
    %c6_152 = arith.constant 6 : index
    %c192_153 = arith.constant 192 : index
    %102 = vector.load %arg3[%c6_152, %c192_153] : memref<8x256xf32, #tpu.memory_space<vmem>>, vector<1x32xf32>
    tpu.vector_store %arg3[%c6_152, %c192_153], %101 {strides = array<i32>} : memref<8x256xf32, #tpu.memory_space<vmem>>, vector<1x32xf32>,
    %c7_154 = arith.constant 7 : index
    %c64_155 = arith.constant 64 : index
    %103 = vector.load %arg3[%c7_154, %c64_155] : memref<8x256xf32, #tpu.memory_space<vmem>>, vector<1x32xf32>
    tpu.vector_store %arg3[%c7_154, %c64_155], %101 {strides = array<i32>} : memref<8x256xf32, #tpu.memory_space<vmem>>, vector<1x32xf32>,
    %c1_156 = arith.constant 1 : index
    %c12_157 = arith.constant 12 : index
    %c0_158 = arith.constant 0 : index
    %104 = vector.load %arg0[%c1_156, %c12_157, %c0_158] : memref<2x16x32xf32, #tpu.memory_space<vmem>>, vector<1x1x32xf32>
    %105 = vector.shape_cast %104 : vector<1x1x32xf32> to vector<1x32xf32>
    %c7_159 = arith.constant 7 : index
    %c96_160 = arith.constant 96 : index
    %106 = vector.load %arg3[%c7_159, %c96_160] : memref<8x256xf32, #tpu.memory_space<vmem>>, vector<1x32xf32>
    tpu.vector_store %arg3[%c7_159, %c96_160], %105 {strides = array<i32>} : memref<8x256xf32, #tpu.memory_space<vmem>>, vector<1x32xf32>,
    %c1_161 = arith.constant 1 : index
    %c13_162 = arith.constant 13 : index
    %c0_163 = arith.constant 0 : index
    %107 = vector.load %arg0[%c1_161, %c13_162, %c0_163] : memref<2x16x32xf32, #tpu.memory_space<vmem>>, vector<1x1x32xf32>
    %108 = vector.shape_cast %107 : vector<1x1x32xf32> to vector<1x32xf32>
    %c7_164 = arith.constant 7 : index
    %c128_165 = arith.constant 128 : index
    %109 = vector.load %arg3[%c7_164, %c128_165] : memref<8x256xf32, #tpu.memory_space<vmem>>, vector<1x32xf32>
    tpu.vector_store %arg3[%c7_164, %c128_165], %108 {strides = array<i32>} : memref<8x256xf32, #tpu.memory_space<vmem>>, vector<1x32xf32>,
    %c1_166 = arith.constant 1 : index
    %c14_167 = arith.constant 14 : index
    %c0_168 = arith.constant 0 : index
    %110 = vector.load %arg0[%c1_166, %c14_167, %c0_168] : memref<2x16x32xf32, #tpu.memory_space<vmem>>, vector<1x1x32xf32>
    %111 = vector.shape_cast %110 : vector<1x1x32xf32> to vector<1x32xf32>
    %c7_169 = arith.constant 7 : index
    %c160_170 = arith.constant 160 : index
    %112 = vector.load %arg3[%c7_169, %c160_170] : memref<8x256xf32, #tpu.memory_space<vmem>>, vector<1x32xf32>
    tpu.vector_store %arg3[%c7_169, %c160_170], %111 {strides = array<i32>} : memref<8x256xf32, #tpu.memory_space<vmem>>, vector<1x32xf32>,
    %c1_171 = arith.constant 1 : index
    %c15_172 = arith.constant 15 : index
    %c0_173 = arith.constant 0 : index
    %113 = vector.load %arg0[%c1_171, %c15_172, %c0_173] : memref<2x16x32xf32, #tpu.memory_space<vmem>>, vector<1x1x32xf32>
    %114 = vector.shape_cast %113 : vector<1x1x32xf32> to vector<1x32xf32>
    %c7_174 = arith.constant 7 : index
    %c192_175 = arith.constant 192 : index
    %115 = vector.load %arg3[%c7_174, %c192_175] : memref<8x256xf32, #tpu.memory_space<vmem>>, vector<1x32xf32>
    tpu.vector_store %arg3[%c7_174, %c192_175], %114 {strides = array<i32>} : memref<8x256xf32, #tpu.memory_space<vmem>>, vector<1x32xf32>,
    %c0_176 = arith.constant 0 : index
    %c0_177 = arith.constant 0 : index
    %116 = vector.load %arg1[%c0_176, %c0_177] : memref<32x256xf32, #tpu.memory_space<vmem>>, vector<32x256xf32>
    %c0_178 = arith.constant 0 : index
    %c0_179 = arith.constant 0 : index
    %117 = vector.load %arg3[%c0_178, %c0_179] : memref<8x256xf32, #tpu.memory_space<vmem>>, vector<8x256xf32>
    %cst_180 = arith.constant dense<0.000000e+00> : vector<32x8xf32>
    %118 = tpu.matmul %116, %117, %cst_180 {dimension_numbers = #tpu.dot_dimension_numbers<[1], [1], [0], [0], [0, 0, 1, 0], [], []>} : vector<32x256xf32>, vector<8x256xf32>, vector<32x8xf32> -> vector<32x8xf32>
    %119 = vector.extract_strided_slice %118 {offsets = [0, 0], sizes = [32, 4], strides = [1, 1]} : vector<32x8xf32> to vector<32x4xf32>
    %c0_181 = arith.constant 0 : index
    %c0_182 = arith.constant 0 : index
    %c0_183 = arith.constant 0 : index
    %120 = vector.load %arg2[%c0_181, %c0_182, %c0_183] : memref<2x32x4xf32, #tpu.memory_space<vmem>>, vector<1x32x4xf32>
    %121 = vector.shape_cast %120 : vector<1x32x4xf32> to vector<32x4xf32>
    %122 = vector.shape_cast %119 : vector<32x4xf32> to vector<1x32x4xf32>
    tpu.vector_store %arg2[%c0_181, %c0_182, %c0_183], %122 {strides = array<i32>} : memref<2x32x4xf32, #tpu.memory_space<vmem>>, vector<1x32x4xf32>,
    %123 = vector.extract_strided_slice %118 {offsets = [0, 4], sizes = [32, 4], strides = [1, 1]} : vector<32x8xf32> to vector<32x4xf32>
    %c1_184 = arith.constant 1 : index
    %c0_185 = arith.constant 0 : index
    %c0_186 = arith.constant 0 : index
    %124 = vector.load %arg2[%c1_184, %c0_185, %c0_186] : memref<2x32x4xf32, #tpu.memory_space<vmem>>, vector<1x32x4xf32>
    %125 = vector.shape_cast %124 : vector<1x32x4xf32> to vector<32x4xf32>
    %126 = vector.shape_cast %123 : vector<32x4xf32> to vector<1x32x4xf32>
    tpu.vector_store %arg2[%c1_184, %c0_185, %c0_186], %126 {strides = array<i32>} : memref<2x32x4xf32, #tpu.memory_space<vmem>>, vector<1x32x4xf32>,
    return
  }
}

</mosaic_0001>

<llo_original>
// kernel: image_embedding_finetune.1
$region0: #{image_embedding_finetune.1}
  #allocation0 [shape = 'u32[]', space=smem, size = 0x4, offset = 0x4, fixed_abs, tag = 'smem constant byte address 0x4 - core index']
  #allocation1 [shape = 'u32[72,128]{1,0:T(1,128)}', space=vmem, size = 0x9000, scoped, tag = 'internal scratch']
  #allocation2 [shape = 'f32[8,256]{1,0:T(8,128)}', space=vmem, size = 0x2000, scoped, tag = 'scratch operand']
  %s0 = inlined_call_operand.hbm [shape: f32[2,16,32], index: 0, kind: input, shape index: {}]
  %s1 = inlined_call_operand.hbm [shape: f32[32,256], index: 1, kind: input, shape index: {}]
  %s2 = inlined_call_operand.vmem [shape: f32[2,32,4], index: 2, kind: output, shape index: {}]
  %s3 = sld [smem:[#allocation0]]
  $region26: #{image_embedding_finetune.1} parent=0
    _
  %s5 = ssub.s32 1, %s3
  %s6 = scalar_select 0, %s5, %s3
  $region1: #{image_embedding_finetune.1} parent=0
    #allocation3 [shape = 'u8[16384]{0}', space=vmem, size = 0x4000, scoped, tag = 'input window, operand 0, single buffered']
    #allocation4 [shape = 's32[1]{0}', space=sflag, size = 0x4, scoped, tag = 'scoped memory for image_embedding_finetune.1']
    #allocation5 [shape = 'u8[32768]{0}', space=vmem, size = 0x8000, scoped, tag = 'input window, operand 1, single buffered']
    #allocation6 [shape = 's32[1]{0}', space=sflag, size = 0x4, scoped, tag = 'scoped memory for image_embedding_finetune.1']
    %7 = vsyncpa [#allocation4], 0
    %8 = vsyncpa [#allocation6], 0
    // Predicated region
    $region2: #{image_embedding_finetune.1} parent=1 // pred_check
      _
    $region3: #{image_embedding_finetune.1} parent=1 // pred_check_branch
      %10 = sbr.rel (0) target = $region5
    $region4: #{image_embedding_finetune.1} parent=1 // pred_region
      %12 = vsyncadd [#allocation4], 0
      %s13 = sshll.u32 %s0, 4
      %s14 = int_to_ptr.hbm [resolvable:$true] %s13
      %s15 = sshll.u32 [#allocation3], 4
      %s16 = int_to_ptr.vmem [resolvable:$true] %s15
      %21 = dma.hbm_to_vmem [thread:$0]  %s14, 512, %s16, [#allocation4], 128, 128, 8
    $region5: #{image_embedding_finetune.1} parent=1 // pred_fallthru
      _
    // Predicated region
    $region6: #{image_embedding_finetune.1} parent=1 // pred_check
      _
    $region7: #{image_embedding_finetune.1} parent=1 // pred_check_branch
      %23 = sbr.rel (0) target = $region9
    $region8: #{image_embedding_finetune.1} parent=1 // pred_region
      %25 = vsyncadd [#allocation6], 0
      %s26 = sshll.u32 %s1, 4
      %s27 = int_to_ptr.hbm [resolvable:$true] %s26
      %s28 = sshll.u32 [#allocation5], 4
      %s29 = int_to_ptr.vmem [resolvable:$true] %s28
      %34 = dma.hbm_to_vmem [thread:$0]  %s27, 1024, %s29, [#allocation6], 256, 256, 16
    $region9: #{image_embedding_finetune.1} parent=1 // pred_fallthru
      _
    // Predicated region
    $region10: #{image_embedding_finetune.1} parent=1 // pred_check
      _
    $region11: #{image_embedding_finetune.1} parent=1 // pred_check_branch
      %36 = sbr.rel (0) target = $region13
    $region12: #{image_embedding_finetune.1} parent=1 // pred_region
      %38 = dma.done [#allocation4], 512
    $region13: #{image_embedding_finetune.1} parent=1 // pred_fallthru
      _
    // Predicated region
    $region14: #{image_embedding_finetune.1} parent=1 // pred_check
      _
    $region15: #{image_embedding_finetune.1} parent=1 // pred_check_branch
      %40 = sbr.rel (0) target = $region17
    $region16: #{image_embedding_finetune.1} parent=1 // pred_region
      %42 = dma.done [#allocation6], 1024
    $region17: #{image_embedding_finetune.1} parent=1 // pred_fallthru
      _
    %43 = vst [vmem:[#allocation2] sm:$0xff] 0.0
    %44 = vst [vmem:[#allocation2 + $0x8] sm:$0xff] 0.0
    %v45 = vld [vmem:[#allocation3] sm:$0x1]
    %47 = vrot.lane.b32.xlu0 %v45, 96
    %v48 = vpop.permute.xlu0 %47
    %vm50 = vcmask 1041152
    %51 = vst.msk [vmem:[#allocation2] sm:$0x1] %vm50, %v48
    %v52 = vld [vmem:[#allocation3 + $0x1] sm:$0x1]
    %vm53 = vcmask 253952
    %54 = vst.msk [vmem:[#allocation2 + $0x8] sm:$0x1] %vm53, %v52
    %55 = vst.msk [vmem:[#allocation2 + $0x1] sm:$0x1] %vm53, %v52
    %v56 = vld [vmem:[#allocation3 + $0x2] sm:$0x1]
    %58 = vrot.lane.b32.xlu0 %v56, 32
    %v59 = vpop.permute.xlu0 %58
    %vm61 = vcmask 516352
    %62 = vst.msk [vmem:[#allocation2 + $0x8] sm:$0x1] %vm61, %v59
    %63 = vst.msk [vmem:[#allocation2 + $0x1] sm:$0x1] %vm61, %v59
    %v64 = vld [vmem:[#allocation3 + $0x3] sm:$0x1]
    %66 = vrot.lane.b32.xlu0 %v64, 64
    %v67 = vpop.permute.xlu0 %66
    %vm69 = vcmask 778752
    %70 = vst.msk [vmem:[#allocation2 + $0x8] sm:$0x1] %vm69, %v67
    %71 = vst.msk [vmem:[#allocation2 + $0x1] sm:$0x1] %vm69, %v67
    %v72 = vld [vmem:[#allocation3 + $0x4] sm:$0x1]
    %74 = vrot.lane.b32.xlu0 %v72, 96
    %v75 = vpop.permute.xlu0 %74
    %77 = vst.msk [vmem:[#allocation2 + $0x1] sm:$0x1] %vm50, %v75
    %v78 = vld [vmem:[#allocation3 + $0x5] sm:$0x1]
    %79 = vst.msk [vmem:[#allocation2 + $0x9] sm:$0x1] %vm53, %v78
    %80 = vst.msk [vmem:[#allocation2 + $0x2] sm:$0x1] %vm53, %v78
    %v81 = vld [vmem:[#allocation3 + $0x6] sm:$0x1]
    %83 = vrot.lane.b32.xlu0 %v81, 32
    %v84 = vpop.permute.xlu0 %83
    %86 = vst.msk [vmem:[#allocation2 + $0x9] sm:$0x1] %vm61, %v84
    %87 = vst.msk [vmem:[#allocation2 + $0x2] sm:$0x1] %vm61, %v84
    %v88 = vld [vmem:[#allocation3 + $0x7] sm:$0x1]
    %90 = vrot.lane.b32.xlu0 %v88, 64
    %v91 = vpop.permute.xlu0 %90
    %93 = vst.msk [vmem:[#allocation2 + $0x9] sm:$0x1] %vm69, %v91
    %94 = vst.msk [vmem:[#allocation2 + $0x2] sm:$0x1] %vm69, %v91
    %v95 = vld [vmem:[#allocation3 + $0x8] sm:$0x1]
    %97 = vrot.lane.b32.xlu0 %v95, 96
    %v98 = vpop.permute.xlu0 %97
    %100 = vst.msk [vmem:[#allocation2 + $0x2] sm:$0x1] %vm50, %v98
    %v101 = vld [vmem:[#allocation3 + $0x9] sm:$0x1]
    %102 = vst.msk [vmem:[#allocation2 + $0xa] sm:$0x1] %vm53, %v101
    %103 = vst.msk [vmem:[#allocation2 + $0x3] sm:$0x1] %vm53, %v101
    %v104 = vld [vmem:[#allocation3 + $0xa] sm:$0x1]
    %106 = vrot.lane.b32.xlu0 %v104, 32
    %v107 = vpop.permute.xlu0 %106
    %109 = vst.msk [vmem:[#allocation2 + $0xa] sm:$0x1] %vm61, %v107
    %110 = vst.msk [vmem:[#allocation2 + $0x3] sm:$0x1] %vm61, %v107
    %v111 = vld [vmem:[#allocation3 + $0xb] sm:$0x1]
    %113 = vrot.lane.b32.xlu0 %v111, 64
    %v114 = vpop.permute.xlu0 %113
    %116 = vst.msk [vmem:[#allocation2 + $0xa] sm:$0x1] %vm69, %v114
    %117 = vst.msk [vmem:[#allocation2 + $0x3] sm:$0x1] %vm69, %v114
    %v118 = vld [vmem:[#allocation3 + $0xc] sm:$0x1]
    %120 = vrot.lane.b32.xlu0 %v118, 96
    %v121 = vpop.permute.xlu0 %120
    %123 = vst.msk [vmem:[#allocation2 + $0x3] sm:$0x1] %vm50, %v121
    %v124 = vld [vmem:[#allocation3 + $0xd] sm:$0x1]
    %125 = vst.msk [vmem:[#allocation2 + $0xb] sm:$0x1] %vm53, %v124
    %v126 = vld [vmem:[#allocation3 + $0xe] sm:$0x1]
    %128 = vrot.lane.b32.xlu0 %v126, 32
    %v129 = vpop.permute.xlu0 %128
    %131 = vst.msk [vmem:[#allocation2 + $0xb] sm:$0x1] %vm61, %v129
    %v132 = vld [vmem:[#allocation3 + $0xf] sm:$0x1]
    %134 = vrot.lane.b32.xlu0 %v132, 64
    %v135 = vpop.permute.xlu0 %134
    %137 = vst.msk [vmem:[#allocation2 + $0xb] sm:$0x1] %vm69, %v135
    %s138 = scalar_lea.vmem [#allocation3], 16
    %v139 = vld [vmem:[%s138] sm:$0x1]
    %141 = vrot.lane.b32.xlu0 %v139, 96
    %v142 = vpop.permute.xlu0 %141
    %144 = vst.msk [vmem:[#allocation2 + $0x4] sm:$0x1] %vm50, %v142
    %v145 = vld [vmem:[%s138 + $0x1] sm:$0x1]
    %146 = vst.msk [vmem:[#allocation2 + $0xc] sm:$0x1] %vm53, %v145
    %147 = vst.msk [vmem:[#allocation2 + $0x5] sm:$0x1] %vm53, %v145
    %v148 = vld [vmem:[%s138 + $0x2] sm:$0x1]
    %150 = vrot.lane.b32.xlu0 %v148, 32
    %v151 = vpop.permute.xlu0 %150
    %153 = vst.msk [vmem:[#allocation2 + $0xc] sm:$0x1] %vm61, %v151
    %154 = vst.msk [vmem:[#allocation2 + $0x5] sm:$0x1] %vm61, %v151
    %v155 = vld [vmem:[%s138 + $0x3] sm:$0x1]
    %157 = vrot.lane.b32.xlu0 %v155, 64
    %v158 = vpop.permute.xlu0 %157
    %160 = vst.msk [vmem:[#allocation2 + $0xc] sm:$0x1] %vm69, %v158
    %161 = vst.msk [vmem:[#allocation2 + $0x5] sm:$0x1] %vm69, %v158
    %v162 = vld [vmem:[%s138 + $0x4] sm:$0x1]
    %164 = vrot.lane.b32.xlu0 %v162, 96
    %v165 = vpop.permute.xlu0 %164
    %167 = vst.msk [vmem:[#allocation2 + $0x5] sm:$0x1] %vm50, %v165
    %v168 = vld [vmem:[%s138 + $0x5] sm:$0x1]
    %169 = vst.msk [vmem:[#allocation2 + $0xd] sm:$0x1] %vm53, %v168
    %170 = vst.msk [vmem:[#allocation2 + $0x6] sm:$0x1] %vm53, %v168
    %v171 = vld [vmem:[%s138 + $0x6] sm:$0x1]
    %173 = vrot.lane.b32.xlu0 %v171, 32
    %v174 = vpop.permute.xlu0 %173
    %176 = vst.msk [vmem:[#allocation2 + $0xd] sm:$0x1] %vm61, %v174
    %177 = vst.msk [vmem:[#allocation2 + $0x6] sm:$0x1] %vm61, %v174
    %v178 = vld [vmem:[%s138 + $0x7] sm:$0x1]
    %180 = vrot.lane.b32.xlu0 %v178, 64
    %v181 = vpop.permute.xlu0 %180
    %183 = vst.msk [vmem:[#allocation2 + $0xd] sm:$0x1] %vm69, %v181
    %184 = vst.msk [vmem:[#allocation2 + $0x6] sm:$0x1] %vm69, %v181
    %v185 = vld [vmem:[%s138 + $0x8] sm:$0x1]
    %187 = vrot.lane.b32.xlu0 %v185, 96
    %v188 = vpop.permute.xlu0 %187
    %190 = vst.msk [vmem:[#allocation2 + $0x6] sm:$0x1] %vm50, %v188
    %v191 = vld [vmem:[%s138 + $0x9] sm:$0x1]
    %192 = vst.msk [vmem:[#allocation2 + $0xe] sm:$0x1] %vm53, %v191
    %193 = vst.msk [vmem:[#allocation2 + $0x7] sm:$0x1] %vm53, %v191
    %v194 = vld [vmem:[%s138 + $0xa] sm:$0x1]
    %196 = vrot.lane.b32.xlu0 %v194, 32
    %v197 = vpop.permute.xlu0 %196
    %199 = vst.msk [vmem:[#allocation2 + $0xe] sm:$0x1] %vm61, %v197
    %200 = vst.msk [vmem:[#allocation2 + $0x7] sm:$0x1] %vm61, %v197
    %v201 = vld [vmem:[%s138 + $0xb] sm:$0x1]
    %203 = vrot.lane.b32.xlu0 %v201, 64
    %v204 = vpop.permute.xlu0 %203
    %206 = vst.msk [vmem:[#allocation2 + $0xe] sm:$0x1] %vm69, %v204
    %207 = vst.msk [vmem:[#allocation2 + $0x7] sm:$0x1] %vm69, %v204
    %v208 = vld [vmem:[%s138 + $0xc] sm:$0x1]
    %210 = vrot.lane.b32.xlu0 %v208, 96
    %v211 = vpop.permute.xlu0 %210
    %213 = vst.msk [vmem:[#allocation2 + $0x7] sm:$0x1] %vm50, %v211
    %v214 = vld [vmem:[%s138 + $0xd] sm:$0x1]
    %215 = vst.msk [vmem:[#allocation2 + $0xf] sm:$0x1] %vm53, %v214
    %v216 = vld [vmem:[%s138 + $0xe] sm:$0x1]
    %218 = vrot.lane.b32.xlu0 %v216, 32
    %v219 = vpop.permute.xlu0 %218
    %221 = vst.msk [vmem:[#allocation2 + $0xf] sm:$0x1] %vm61, %v219
    %v222 = vld [vmem:[%s138 + $0xf] sm:$0x1]
    %224 = vrot.lane.b32.xlu0 %v222, 64
    %v225 = vpop.permute.xlu0 %224
    %227 = vst.msk [vmem:[#allocation2 + $0xf] sm:$0x1] %vm69, %v225
    %v228 = vld [vmem:[#allocation5] sm:$0xff]
    %v229 = vld [vmem:[#allocation5 + $0x8] sm:$0xff]
    %v230 = vld [vmem:[#allocation5 + $0x10] sm:$0xff]
    %v231 = vld [vmem:[#allocation5 + $0x18] sm:$0xff]
    %v232 = vld [vmem:[#allocation5 + $0x20] sm:$0xff]
    %v233 = vld [vmem:[#allocation5 + $0x28] sm:$0xff]
    %v234 = vld [vmem:[#allocation5 + $0x30] sm:$0xff]
    %v235 = vld [vmem:[#allocation5 + $0x38] sm:$0xff]
    %v236 = vld [vmem:[#allocation2] sm:$0xff]
    %v237 = vld [vmem:[#allocation2 + $0x8] sm:$0xff]
    %238 = vmatpush.xpose.msra.mxu0 0.0
    %239 = vmatpush.xpose.msra.mxu0 0.0
    %240 = vmatpush.xpose.msra.mxu0 0.0
    %241 = vmatpush.xpose.msra.mxu0 0.0
    %242 = vmatpush.xpose.msra.mxu0 0.0
    %243 = vmatpush.xpose.msra.mxu0 0.0
    %244 = vmatpush.xpose.msra.mxu0 0.0
    %245 = vmatpush.xpose.msra.mxu0 0.0
    %246 = vmatpush.xpose.msra.mxu0 0.0
    %247 = vmatpush.xpose.msra.mxu0 0.0
    %248 = vmatpush.xpose.msra.mxu0 0.0
    %249 = vmatpush.xpose.msra.mxu0 0.0
    %250 = vmatpush.xpose.msra.mxu0 0.0
    %251 = vmatpush.xpose.msra.mxu0 0.0
    %252 = vmatpush.xpose.msra.mxu0 0.0
    %253 = vmatpush.xpose.msra.mxu0 %v236
    %254 = vmatmul.f32.gmra.mxu0 %v228
    %v255 = vpop.f32.mrf.mxu0
    %v256 = vadd.f32 0.0, %v255
    %257 = vmatmul.f32.gmra.mxu0 %v230
    %v258 = vpop.f32.mrf.mxu0
    %v259 = vadd.f32 0.0, %v258
    %260 = vmatmul.f32.gmra.mxu0 %v232
    %v261 = vpop.f32.mrf.mxu0
    %v262 = vadd.f32 0.0, %v261
    %263 = vmatmul.f32.gmra.mxu0 %v234
    %v264 = vpop.f32.mrf.mxu0
    %v265 = vadd.f32 0.0, %v264
    %266 = vdwg.mxu0
    %267 = vmatpush.xpose.msra.mxu0 0.0
    %268 = vmatpush.xpose.msra.mxu0 0.0
    %269 = vmatpush.xpose.msra.mxu0 0.0
    %270 = vmatpush.xpose.msra.mxu0 0.0
    %271 = vmatpush.xpose.msra.mxu0 0.0
    %272 = vmatpush.xpose.msra.mxu0 0.0
    %273 = vmatpush.xpose.msra.mxu0 0.0
    %274 = vmatpush.xpose.msra.mxu0 0.0
    %275 = vmatpush.xpose.msra.mxu0 0.0
    %276 = vmatpush.xpose.msra.mxu0 0.0
    %277 = vmatpush.xpose.msra.mxu0 0.0
    %278 = vmatpush.xpose.msra.mxu0 0.0
    %279 = vmatpush.xpose.msra.mxu0 0.0
    %280 = vmatpush.xpose.msra.mxu0 0.0
    %281 = vmatpush.xpose.msra.mxu0 0.0
    %282 = vmatpush.xpose.msra.mxu0 %v237
    %283 = vmatmul.f32.gmra.mxu0 %v229
    %v284 = vpop.f32.mrf.mxu0
    %v285 = vadd.f32 %v256, %v284
    %286 = vmatmul.f32.gmra.mxu0 %v231
    %v287 = vpop.f32.mrf.mxu0
    %v288 = vadd.f32 %v259, %v287
    %289 = vmatmul.f32.gmra.mxu0 %v233
    %v290 = vpop.f32.mrf.mxu0
    %v291 = vadd.f32 %v262, %v290
    %292 = vmatmul.f32.gmra.mxu0 %v235
    %v293 = vpop.f32.mrf.mxu0
    %v294 = vadd.f32 %v265, %v293
    %295 = vdwg.mxu0
    %vm296 = vcmask 31744
    %297 = vst.msk [vmem:[%s2] sm:$0xff] %vm296, %v285
    %298 = vst.msk [vmem:[%s2 + $0x8] sm:$0xff] %vm296, %v288
    %299 = vst.msk [vmem:[%s2 + $0x10] sm:$0xff] %vm296, %v291
    %300 = vst.msk [vmem:[%s2 + $0x18] sm:$0xff] %vm296, %v294
    %305 = vrot.lane.b32.xlu0 %v285, 124
    %v306 = vpop.permute.xlu0 %305
    %307 = vrot.lane.b32.xlu0 %v288, 124
    %v308 = vpop.permute.xlu0 %307
    %309 = vrot.lane.b32.xlu0 %v291, 124
    %v310 = vpop.permute.xlu0 %309
    %311 = vrot.lane.b32.xlu0 %v294, 124
    %v312 = vpop.permute.xlu0 %311
    %s317 = scalar_lea.vmem %s2, 32
    %318 = vst.msk [vmem:[%s317] sm:$0xff] %vm296, %v306
    %319 = vst.msk [vmem:[%s317 + $0x8] sm:$0xff] %vm296, %v308
    %320 = vst.msk [vmem:[%s317 + $0x10] sm:$0xff] %vm296, %v310
    %321 = vst.msk [vmem:[%s317 + $0x18] sm:$0xff] %vm296, %v312
    // Predicated region
    $region18: #{image_embedding_finetune.1} parent=1 // pred_check
      _
    $region19: #{image_embedding_finetune.1} parent=1 // pred_check_branch
      %323 = sbr.rel (0) target = $region21
    $region20: #{image_embedding_finetune.1} parent=1 // pred_region
      _
    $region21: #{image_embedding_finetune.1} parent=1 // pred_fallthru
      _
    // Predicated region
    $region22: #{image_embedding_finetune.1} parent=1 // pred_check
      _
    $region23: #{image_embedding_finetune.1} parent=1 // pred_check_branch
      %325 = sbr.rel (0) target = $region25
    $region24: #{image_embedding_finetune.1} parent=1 // pred_region
      _
    $region25: #{image_embedding_finetune.1} parent=1 // pred_fallthru
      _
    %326 = vsyncpa [#allocation4], 1
    %327 = vsyncpa [#allocation6], 1

</llo_original>
